<compile_context>
chip_gen: v7x
topology: tpu7x:2x2x1
jax: 0.10.0
libtpu: 0.0.40
codegen_flags: <defaults>
</compile_context>

<pallas_src>
import functools

import jax
import jax.numpy as jnp
from jax import lax
from jax.experimental import pallas as pl
from jax.experimental.pallas import tpu as pltpu


def _self_attention_kernel(q_ref, k_ref, v_ref,
                           wq_ref, bq_ref,
                           wk_ref, bk_ref,
                           wv_ref, bv_ref,
                           wo_ref, bo_ref,
                           o_ref,
                           acc_ref,
                           *, inv_scale):
    h = pl.program_id(2)

    @pl.when(h == 0)
    def _init():
        acc_ref[...] = jnp.zeros_like(acc_ref)

    q = q_ref[0]          # (TQ, H) bf16
    k = k_ref[0]          # (S,  H) bf16
    v = v_ref[0]          # (S,  H) bf16

    wq = wq_ref[0]        # (H, d) bf16  (head h's slab of Wq)
    wk = wk_ref[0]
    wv = wv_ref[0]
    wo = wo_ref[0]        # (d, H) bf16  (head h's slab of Wo)

    # Per-head projections; f32 accumulation, bias add in f32.
    # 1/sqrt(d) folded into Q here (cheaper than scaling the (TQ,S) energy).
    qh = (jnp.dot(q, wq, preferred_element_type=jnp.float32)
          + bq_ref[0]) * inv_scale                         # (TQ, d) f32
    kh = jnp.dot(k, wk, preferred_element_type=jnp.float32) + bk_ref[0]   # (S, d) f32
    vh = jnp.dot(v, wv, preferred_element_type=jnp.float32) + bv_ref[0]   # (S, d) f32

    # energy = qh @ kh^T without an explicit transpose: contract the last dims.
    energy = lax.dot_general(
        qh.astype(jnp.bfloat16), kh.astype(jnp.bfloat16),
        dimension_numbers=(((1,), (1,)), ((), ())),
        preferred_element_type=jnp.float32)                # (TQ, S) f32

    # TODO(synk): mask path and attention-dropout omitted (mask=None, eval mode).
    m = jnp.max(energy, axis=-1, keepdims=True)
    p = jnp.exp(energy - m)
    denom = jnp.sum(p, axis=-1, keepdims=True)
    attn = p * pl.reciprocal(denom, approx=True)           # softmax, EUP recip

    ctx = jnp.dot(attn.astype(jnp.bfloat16), vh.astype(jnp.bfloat16),
                  preferred_element_type=jnp.float32)      # (TQ, d) f32

    # Output projection accumulated across heads (replaces concat + full matmul).
    acc_ref[...] += jnp.dot(ctx.astype(jnp.bfloat16), wo,
                            preferred_element_type=jnp.float32)

    @pl.when(h == pl.num_programs(2) - 1)
    def _store():
        o_ref[0] = (acc_ref[...] + bo_ref[...]).astype(o_ref.dtype)


def self_attention_pallas(query, key, value, params, *, n_heads, q_tile=512):
    """params = (wq, bq, wk, bk, wv, bv, wo, bo); weights (H, H) stored as
    (in, out), biases (1, H)."""
    B, S, H = query.shape
    assert H % n_heads == 0
    d = H // n_heads
    inv_scale = 1.0 / (float(d) ** 0.5)   # torch.sqrt(FloatTensor([hid_dim // n_heads]))

    wq, bq, wk, bk, wv, bv, wo, bo = params

    # Head-major weight slabs so BlockSpec can hand each grid step just its head:
    #   input projections: (n_heads, H, d);  output projection: (n_heads, d, H).
    def heads_in(w):
        return w.reshape(H, n_heads, d).transpose(1, 0, 2).astype(jnp.bfloat16)

    def heads_bias(b):
        return b.reshape(n_heads, 1, d).astype(jnp.float32)

    wq3, wk3, wv3 = heads_in(wq), heads_in(wk), heads_in(wv)
    bq3, bk3, bv3 = heads_bias(bq), heads_bias(bk), heads_bias(bv)
    wo3 = wo.reshape(n_heads, d, H).astype(jnp.bfloat16)
    bo2 = bo.astype(jnp.float32)

    # bf16 activations for the MXU / half the HBM traffic; f32 accumulation in-kernel.
    q_bf = query.astype(jnp.bfloat16)
    k_bf = key.astype(jnp.bfloat16)
    v_bf = value.astype(jnp.bfloat16)

    # Query-tile size (flash-style query tiling; full S for small sequences).
    TQ = S if S <= q_tile else q_tile
    assert S % TQ == 0, "seq_len must be divisible by the query tile size"
    n_q = S // TQ

    grid = (B, n_q, n_heads)

    q_spec = pl.BlockSpec((1, TQ, H), lambda b, qi, h: (b, qi, 0))
    kv_spec = pl.BlockSpec((1, S, H), lambda b, qi, h: (b, 0, 0))
    w_in_spec = pl.BlockSpec((1, H, d), lambda b, qi, h: (h, 0, 0))
    b_in_spec = pl.BlockSpec((1, 1, d), lambda b, qi, h: (h, 0, 0))
    w_out_spec = pl.BlockSpec((1, d, H), lambda b, qi, h: (h, 0, 0))
    b_out_spec = pl.BlockSpec((1, H), lambda b, qi, h: (0, 0))
    o_spec = pl.BlockSpec((1, TQ, H), lambda b, qi, h: (b, qi, 0))

    kernel = functools.partial(_self_attention_kernel, inv_scale=inv_scale)

    return pl.pallas_call(
        kernel,
        out_shape=jax.ShapeDtypeStruct((B, S, H), query.dtype),
        grid=grid,
        in_specs=[q_spec, kv_spec, kv_spec,
                  w_in_spec, b_in_spec,
                  w_in_spec, b_in_spec,
                  w_in_spec, b_in_spec,
                  w_out_spec, b_out_spec],
        out_specs=o_spec,
        scratch_shapes=[pltpu.VMEM((TQ, H), jnp.float32)],
        compiler_params=pltpu.CompilerParams(
            dimension_semantics=("parallel", "parallel", "arbitrary"),
            vmem_limit_bytes=64 * 1024 * 1024),
    )(q_bf, k_bf, v_bf, wq3, bq3, wk3, bk3, wv3, bv3, wo3, bo2)


def self_attention_ref(query, key, value, params, *, n_heads):
    """Pure-JAX (fp32) reference mirroring the PyTorch forward (mask=None, eval)."""
    wq, bq, wk, bk, wv, bv, wo, bo = params
    B, S, H = query.shape
    d = H // n_heads
    scale = float(d) ** 0.5

    Q = query @ wq + bq
    K = key @ wk + bk
    V = value @ wv + bv

    Q = Q.reshape(B, S, n_heads, d).transpose(0, 2, 1, 3)
    K = K.reshape(B, S, n_heads, d).transpose(0, 2, 1, 3)
    V = V.reshape(B, S, n_heads, d).transpose(0, 2, 1, 3)

    energy = jnp.einsum('bhqd,bhkd->bhqk', Q, K) / scale
    attn = jax.nn.softmax(energy, axis=-1)
    x = jnp.einsum('bhqk,bhkd->bhqd', attn, V)
    x = x.transpose(0, 2, 1, 3).reshape(B, S, H)
    return x @ wo + bo


def init_params(key, hid_dim):
    """Deterministic parameter init (synthetic; not a checkpoint load)."""
    ks = jax.random.split(key, 8)
    H = hid_dim
    bound = 1.0 / (H ** 0.5)

    def w(k):  # stored as (in, out)
        return jax.random.uniform(k, (H, H), jnp.float32, -bound, bound)

    def b(k):
        return jax.random.uniform(k, (1, H), jnp.float32, -bound, bound)

    return (w(ks[0]), b(ks[1]),
            w(ks[2]), b(ks[3]),
            w(ks[4]), b(ks[5]),
            w(ks[6]), b(ks[7]))


if __name__ == "__main__":
    B, S, H, NH = 2, 8, 32, 4

    root = jax.random.PRNGKey(0)
    k_q, k_k, k_v, k_p = jax.random.split(root, 4)

    query = jax.random.normal(k_q, (B, S, H), jnp.float32)
    key_ = jax.random.normal(k_k, (B, S, H), jnp.float32)
    value = jax.random.normal(k_v, (B, S, H), jnp.float32)
    params = init_params(k_p, H)

    out = self_attention_pallas(query, key_, value, params, n_heads=NH)
    out = jax.block_until_ready(out)

    ref = self_attention_ref(query, key_, value, params, n_heads=NH)
    assert out.shape == (B, S, H)
    # bf16 MXU operands + approximate reciprocal -> loosened tolerance vs fp32 ref.
    assert jnp.allclose(out, ref, rtol=5e-2, atol=5e-2), \
        f"max abs err {jnp.max(jnp.abs(out - ref))}"

    print("KERNEL_OK")
</pallas_src>

<mosaic_0001>
module attributes {stable_mosaic.version = 11 : i64} {
  func.func @_self_attention_kernel(%arg0: i32, %arg1: i32, %arg2: i32, %arg3: memref<1x8x32xbf16, #tpu.memory_space<vmem>>, %arg4: memref<1x8x32xbf16, #tpu.memory_space<vmem>>, %arg5: memref<1x8x32xbf16, #tpu.memory_space<vmem>>, %arg6: memref<1x32x8xbf16, #tpu.memory_space<vmem>>, %arg7: memref<1x1x8xf32, #tpu.memory_space<vmem>>, %arg8: memref<1x32x8xbf16, #tpu.memory_space<vmem>>, %arg9: memref<1x1x8xf32, #tpu.memory_space<vmem>>, %arg10: memref<1x32x8xbf16, #tpu.memory_space<vmem>>, %arg11: memref<1x1x8xf32, #tpu.memory_space<vmem>>, %arg12: memref<1x8x32xbf16, #tpu.memory_space<vmem>>, %arg13: memref<1x32xf32, #tpu.memory_space<vmem>>, %arg14: memref<1x8x32xf32, #tpu.memory_space<vmem>>, %arg15: memref<8x32xf32, #tpu.memory_space<vmem>>) attributes {dimension_semantics = [#tpu.dimension_semantics<parallel>, #tpu.dimension_semantics<parallel>, #tpu.dimension_semantics<arbitrary>], iteration_bounds = array<i64: 2, 1, 4>, scalar_prefetch = 0 : i64, scratch_operands = 1 : i64, tpu.core_type = #tpu.core_type<tc>, window_params = [{transform_indices = @transform_0, window_bounds = array<i64: 1, 8, 32>}, {transform_indices = @transform_1, window_bounds = array<i64: 1, 8, 32>}, {transform_indices = @transform_2, window_bounds = array<i64: 1, 8, 32>}, {transform_indices = @transform_3, window_bounds = array<i64: 1, 32, 8>}, {transform_indices = @transform_4, window_bounds = array<i64: 1, 1, 8>}, {transform_indices = @transform_5, window_bounds = array<i64: 1, 32, 8>}, {transform_indices = @transform_6, window_bounds = array<i64: 1, 1, 8>}, {transform_indices = @transform_7, window_bounds = array<i64: 1, 32, 8>}, {transform_indices = @transform_8, window_bounds = array<i64: 1, 1, 8>}, {transform_indices = @transform_9, window_bounds = array<i64: 1, 8, 32>}, {pipeline_mode = #tpu.pipeline_mode<synchronous>, transform_indices = @transform_10, window_bounds = array<i64: 1, 32>}, {transform_indices = @transform_11, window_bounds = array<i64: 1, 8, 32>}]} {
    %c0_i32 = arith.constant 0 : i32
    %0 = arith.cmpi eq, %arg2, %c0_i32 : i32
    %1 = arith.extui %0 : i1 to i32
    %c0_i32_0 = arith.constant 0 : i32
    %2 = arith.cmpi ne, %1, %c0_i32_0 : i32
    scf.if %2 {
      %cst_43 = arith.constant 0.000000e+00 : f32
      %58 = vector.broadcast %cst_43 : f32 to vector<8x32xf32>
      %c0_44 = arith.constant 0 : index
      %c0_45 = arith.constant 0 : index
      %59 = vector.load %arg15[%c0_44, %c0_45] : memref<8x32xf32, #tpu.memory_space<vmem>>, vector<8x32xf32>
      tpu.vector_store %arg15[%c0_44, %c0_45], %58 {strides = array<i32>} : memref<8x32xf32, #tpu.memory_space<vmem>>, vector<8x32xf32>,
    } else {
    }
    %c0 = arith.constant 0 : index
    %c0_1 = arith.constant 0 : index
    %c0_2 = arith.constant 0 : index
    %3 = vector.load %arg3[%c0, %c0_1, %c0_2] : memref<1x8x32xbf16, #tpu.memory_space<vmem>>, vector<1x8x32xbf16>
    %4 = vector.shape_cast %3 : vector<1x8x32xbf16> to vector<8x32xbf16>
    %c0_3 = arith.constant 0 : index
    %c0_4 = arith.constant 0 : index
    %c0_5 = arith.constant 0 : index
    %5 = vector.load %arg4[%c0_3, %c0_4, %c0_5] : memref<1x8x32xbf16, #tpu.memory_space<vmem>>, vector<1x8x32xbf16>
    %6 = vector.shape_cast %5 : vector<1x8x32xbf16> to vector<8x32xbf16>
    %c0_6 = arith.constant 0 : index
    %c0_7 = arith.constant 0 : index
    %c0_8 = arith.constant 0 : index
    %7 = vector.load %arg5[%c0_6, %c0_7, %c0_8] : memref<1x8x32xbf16, #tpu.memory_space<vmem>>, vector<1x8x32xbf16>
    %8 = vector.shape_cast %7 : vector<1x8x32xbf16> to vector<8x32xbf16>
    %c0_9 = arith.constant 0 : index
    %c0_10 = arith.constant 0 : index
    %c0_11 = arith.constant 0 : index
    %9 = vector.load %arg6[%c0_9, %c0_10, %c0_11] : memref<1x32x8xbf16, #tpu.memory_space<vmem>>, vector<1x32x8xbf16>
    %10 = vector.shape_cast %9 : vector<1x32x8xbf16> to vector<32x8xbf16>
    %c0_12 = arith.constant 0 : index
    %c0_13 = arith.constant 0 : index
    %c0_14 = arith.constant 0 : index
    %11 = vector.load %arg8[%c0_12, %c0_13, %c0_14] : memref<1x32x8xbf16, #tpu.memory_space<vmem>>, vector<1x32x8xbf16>
    %12 = vector.shape_cast %11 : vector<1x32x8xbf16> to vector<32x8xbf16>
    %c0_15 = arith.constant 0 : index
    %c0_16 = arith.constant 0 : index
    %c0_17 = arith.constant 0 : index
    %13 = vector.load %arg10[%c0_15, %c0_16, %c0_17] : memref<1x32x8xbf16, #tpu.memory_space<vmem>>, vector<1x32x8xbf16>
    %14 = vector.shape_cast %13 : vector<1x32x8xbf16> to vector<32x8xbf16>
    %c0_18 = arith.constant 0 : index
    %c0_19 = arith.constant 0 : index
    %c0_20 = arith.constant 0 : index
    %15 = vector.load %arg12[%c0_18, %c0_19, %c0_20] : memref<1x8x32xbf16, #tpu.memory_space<vmem>>, vector<1x8x32xbf16>
    %16 = vector.shape_cast %15 : vector<1x8x32xbf16> to vector<8x32xbf16>
    %cst = arith.constant dense<0.000000e+00> : vector<8x8xf32>
    %17 = tpu.matmul %4, %10, %cst {dimension_numbers = #tpu.dot_dimension_numbers<[1], [0], [0], [1], [0, 0, 1, 1], [], []>} : vector<8x32xbf16>, vector<32x8xbf16>, vector<8x8xf32> -> vector<8x8xf32>
    %c0_21 = arith.constant 0 : index
    %c0_22 = arith.constant 0 : index
    %c0_23 = arith.constant 0 : index
    %18 = vector.load %arg7[%c0_21, %c0_22, %c0_23] : memref<1x1x8xf32, #tpu.memory_space<vmem>>, vector<1x1x8xf32>
    %19 = vector.shape_cast %18 : vector<1x1x8xf32> to vector<1x8xf32>
    %20 = vector.broadcast %19 : vector<1x8xf32> to vector<8x8xf32>
    %21 = arith.addf %17, %20 : vector<8x8xf32>
    %cst_24 = arith.constant 0.353553385 : f32
    %22 = vector.broadcast %cst_24 : f32 to vector<8x8xf32>
    %23 = arith.mulf %21, %22 : vector<8x8xf32>
    %cst_25 = arith.constant dense<0.000000e+00> : vector<8x8xf32>
    %24 = tpu.matmul %6, %12, %cst_25 {dimension_numbers = #tpu.dot_dimension_numbers<[1], [0], [0], [1], [0, 0, 1, 1], [], []>} : vector<8x32xbf16>, vector<32x8xbf16>, vector<8x8xf32> -> vector<8x8xf32>
    %c0_26 = arith.constant 0 : index
    %c0_27 = arith.constant 0 : index
    %c0_28 = arith.constant 0 : index
    %25 = vector.load %arg9[%c0_26, %c0_27, %c0_28] : memref<1x1x8xf32, #tpu.memory_space<vmem>>, vector<1x1x8xf32>
    %26 = vector.shape_cast %25 : vector<1x1x8xf32> to vector<1x8xf32>
    %27 = vector.broadcast %26 : vector<1x8xf32> to vector<8x8xf32>
    %28 = arith.addf %24, %27 : vector<8x8xf32>
    %cst_29 = arith.constant dense<0.000000e+00> : vector<8x8xf32>
    %29 = tpu.matmul %8, %14, %cst_29 {dimension_numbers = #tpu.dot_dimension_numbers<[1], [0], [0], [1], [0, 0, 1, 1], [], []>} : vector<8x32xbf16>, vector<32x8xbf16>, vector<8x8xf32> -> vector<8x8xf32>
    %c0_30 = arith.constant 0 : index
    %c0_31 = arith.constant 0 : index
    %c0_32 = arith.constant 0 : index
    %30 = vector.load %arg11[%c0_30, %c0_31, %c0_32] : memref<1x1x8xf32, #tpu.memory_space<vmem>>, vector<1x1x8xf32>
    %31 = vector.shape_cast %30 : vector<1x1x8xf32> to vector<1x8xf32>
    %32 = vector.broadcast %31 : vector<1x8xf32> to vector<8x8xf32>
    %33 = arith.addf %29, %32 : vector<8x8xf32>
    %34 = arith.truncf %23 : vector<8x8xf32> to vector<8x8xbf16>
    %35 = arith.truncf %28 : vector<8x8xf32> to vector<8x8xbf16>
    %cst_33 = arith.constant dense<0.000000e+00> : vector<8x8xf32>
    %36 = tpu.matmul %34, %35, %cst_33 {dimension_numbers = #tpu.dot_dimension_numbers<[1], [1], [0], [0], [0, 0, 1, 0], [], []>} : vector<8x8xbf16>, vector<8x8xbf16>, vector<8x8xf32> -> vector<8x8xf32>
    %cst_34 = arith.constant dense<0xFF800000> : vector<8xf32>
    %37 = vector.multi_reduction <maximumf>, %36, %cst_34 [1] : vector<8x8xf32> to vector<8xf32>
    %38 = vector.shape_cast %37 : vector<8xf32> to vector<8x1xf32>
    %39 = vector.broadcast %38 : vector<8x1xf32> to vector<8x8xf32>
    %40 = arith.subf %36, %39 : vector<8x8xf32>
    %41 = math.exp %40 : vector<8x8xf32>
    %cst_35 = arith.constant dense<0.000000e+00> : vector<8xf32>
    %42 = vector.multi_reduction <add>, %41, %cst_35 [1] : vector<8x8xf32> to vector<8xf32>
    %43 = vector.shape_cast %42 : vector<8xf32> to vector<8x1xf32>
    %44 = tpu.reciprocal %43 {approx = true} : vector<8x1xf32> -> vector<8x1xf32>
    %45 = vector.broadcast %44 : vector<8x1xf32> to vector<8x8xf32>
    %46 = arith.mulf %41, %45 : vector<8x8xf32>
    %47 = arith.truncf %46 : vector<8x8xf32> to vector<8x8xbf16>
    %48 = arith.truncf %33 : vector<8x8xf32> to vector<8x8xbf16>
    %cst_36 = arith.constant dense<0.000000e+00> : vector<8x8xf32>
    %49 = tpu.matmul %47, %48, %cst_36 {dimension_numbers = #tpu.dot_dimension_numbers<[1], [0], [0], [1], [0, 0, 1, 1], [], []>} : vector<8x8xbf16>, vector<8x8xbf16>, vector<8x8xf32> -> vector<8x8xf32>
    %c0_37 = arith.constant 0 : index
    %c0_38 = arith.constant 0 : index
    %50 = vector.load %arg15[%c0_37, %c0_38] : memref<8x32xf32, #tpu.memory_space<vmem>>, vector<8x32xf32>
    %51 = arith.truncf %49 : vector<8x8xf32> to vector<8x8xbf16>
    %cst_39 = arith.constant dense<0.000000e+00> : vector<8x32xf32>
    %52 = tpu.matmul %51, %16, %cst_39 {dimension_numbers = #tpu.dot_dimension_numbers<[1], [0], [0], [1], [0, 0, 1, 1], [], []>} : vector<8x8xbf16>, vector<8x32xbf16>, vector<8x32xf32> -> vector<8x32xf32>
    %53 = arith.addf %50, %52 : vector<8x32xf32>
    %c0_40 = arith.constant 0 : index
    %c0_41 = arith.constant 0 : index
    %54 = vector.load %arg15[%c0_40, %c0_41] : memref<8x32xf32, #tpu.memory_space<vmem>>, vector<8x32xf32>
    tpu.vector_store %arg15[%c0_40, %c0_41], %53 {strides = array<i32>} : memref<8x32xf32, #tpu.memory_space<vmem>>, vector<8x32xf32>,
    %c3_i32 = arith.constant 3 : i32
    %55 = arith.cmpi eq, %arg2, %c3_i32 : i32
    %56 = arith.extui %55 : i1 to i32
    %c0_i32_42 = arith.constant 0 : i32
    %57 = arith.cmpi ne, %56, %c0_i32_42 : i32
    scf.if %57 {
      %c0_43 = arith.constant 0 : index
      %c0_44 = arith.constant 0 : index
      %58 = vector.load %arg15[%c0_43, %c0_44] : memref<8x32xf32, #tpu.memory_space<vmem>>, vector<8x32xf32>
      %c0_45 = arith.constant 0 : index
      %c0_46 = arith.constant 0 : index
      %59 = vector.load %arg13[%c0_45, %c0_46] : memref<1x32xf32, #tpu.memory_space<vmem>>, vector<1x32xf32>
      %60 = vector.broadcast %59 : vector<1x32xf32> to vector<8x32xf32>
      %61 = arith.addf %58, %60 : vector<8x32xf32>
      %c0_47 = arith.constant 0 : index
      %c0_48 = arith.constant 0 : index
      %c0_49 = arith.constant 0 : index
      %62 = vector.load %arg14[%c0_47, %c0_48, %c0_49] : memref<1x8x32xf32, #tpu.memory_space<vmem>>, vector<1x8x32xf32>
      %63 = vector.shape_cast %62 : vector<1x8x32xf32> to vector<8x32xf32>
      %64 = vector.shape_cast %61 : vector<8x32xf32> to vector<1x8x32xf32>
      tpu.vector_store %arg14[%c0_47, %c0_48, %c0_49], %64 {strides = array<i32>} : memref<1x8x32xf32, #tpu.memory_space<vmem>>, vector<1x8x32xf32>,
    } else {
    }
    return
  }
  func.func @transform_0(%arg0: i32, %arg1: i32, %arg2: i32) -> (i32, i32, i32) {
    %c0_i32 = arith.constant 0 : i32
    %c0_i32_0 = arith.constant 0 : i32
    return %arg0, %arg1, %c0_i32 : i32, i32, i32
  }
  func.func @transform_1(%arg0: i32, %arg1: i32, %arg2: i32) -> (i32, i32, i32) {
    %c0_i32 = arith.constant 0 : i32
    %c0_i32_0 = arith.constant 0 : i32
    %c0_i32_1 = arith.constant 0 : i32
    return %arg0, %c0_i32, %c0_i32_0 : i32, i32, i32
  }
  func.func @transform_2(%arg0: i32, %arg1: i32, %arg2: i32) -> (i32, i32, i32) {
    %c0_i32 = arith.constant 0 : i32
    %c0_i32_0 = arith.constant 0 : i32
    %c0_i32_1 = arith.constant 0 : i32
    return %arg0, %c0_i32, %c0_i32_0 : i32, i32, i32
  }
  func.func @transform_3(%arg0: i32, %arg1: i32, %arg2: i32) -> (i32, i32, i32) {
    %c0_i32 = arith.constant 0 : i32
    %c0_i32_0 = arith.constant 0 : i32
    %c0_i32_1 = arith.constant 0 : i32
    return %arg2, %c0_i32, %c0_i32_0 : i32, i32, i32
  }
  func.func @transform_4(%arg0: i32, %arg1: i32, %arg2: i32) -> (i32, i32, i32) {
    %c0_i32 = arith.constant 0 : i32
    %c0_i32_0 = arith.constant 0 : i32
    %c0_i32_1 = arith.constant 0 : i32
    return %arg2, %c0_i32, %c0_i32_0 : i32, i32, i32
  }
  func.func @transform_5(%arg0: i32, %arg1: i32, %arg2: i32) -> (i32, i32, i32) {
    %c0_i32 = arith.constant 0 : i32
    %c0_i32_0 = arith.constant 0 : i32
    %c0_i32_1 = arith.constant 0 : i32
    return %arg2, %c0_i32, %c0_i32_0 : i32, i32, i32
  }
  func.func @transform_6(%arg0: i32, %arg1: i32, %arg2: i32) -> (i32, i32, i32) {
    %c0_i32 = arith.constant 0 : i32
    %c0_i32_0 = arith.constant 0 : i32
    %c0_i32_1 = arith.constant 0 : i32
    return %arg2, %c0_i32, %c0_i32_0 : i32, i32, i32
  }
  func.func @transform_7(%arg0: i32, %arg1: i32, %arg2: i32) -> (i32, i32, i32) {
    %c0_i32 = arith.constant 0 : i32
    %c0_i32_0 = arith.constant 0 : i32
    %c0_i32_1 = arith.constant 0 : i32
    return %arg2, %c0_i32, %c0_i32_0 : i32, i32, i32
  }
  func.func @transform_8(%arg0: i32, %arg1: i32, %arg2: i32) -> (i32, i32, i32) {
    %c0_i32 = arith.constant 0 : i32
    %c0_i32_0 = arith.constant 0 : i32
    %c0_i32_1 = arith.constant 0 : i32
    return %arg2, %c0_i32, %c0_i32_0 : i32, i32, i32
  }
  func.func @transform_9(%arg0: i32, %arg1: i32, %arg2: i32) -> (i32, i32, i32) {
    %c0_i32 = arith.constant 0 : i32
    %c0_i32_0 = arith.constant 0 : i32
    %c0_i32_1 = arith.constant 0 : i32
    return %arg2, %c0_i32, %c0_i32_0 : i32, i32, i32
  }
  func.func @transform_10(%arg0: i32, %arg1: i32, %arg2: i32) -> (i32, i32) {
    %c0_i32 = arith.constant 0 : i32
    %c0_i32_0 = arith.constant 0 : i32
    %c0_i32_1 = arith.constant 0 : i32
    return %c0_i32, %c0_i32_0 : i32, i32
  }
  func.func @transform_11(%arg0: i32, %arg1: i32, %arg2: i32) -> (i32, i32, i32) {
    %c0_i32 = arith.constant 0 : i32
    %c0_i32_0 = arith.constant 0 : i32
    return %arg0, %arg1, %c0_i32 : i32, i32, i32
  }
}

</mosaic_0001>

<llo_original>
// kernel: tpu_custom_call.1
$region0: #{tpu_custom_call.1}
  #allocation0 [shape = 'u32[]', space=smem, size = 0x4, offset = 0x4, fixed_abs, tag = 'smem constant byte address 0x4 - core index']
  #allocation1 [shape = 'u32[144,128]{1,0:T(1,128)}', space=vmem, size = 0x12000, scoped, tag = 'internal scratch']
  #allocation2 [shape = 'f32[8,32]{1,0:T(8,128)}', space=vmem, size = 0x1000, scoped, tag = 'scratch operand']
  %s0 = inlined_call_operand.hbm [shape: bf16[2,8,32], index: 0, kind: input, shape index: {}]
  %s1 = inlined_call_operand.hbm [shape: bf16[2,8,32], index: 1, kind: input, shape index: {}]
  %s2 = inlined_call_operand.hbm [shape: bf16[2,8,32], index: 2, kind: input, shape index: {}]
  %s3 = inlined_call_operand.hbm [shape: bf16[4,32,8], index: 3, kind: input, shape index: {}]
  %s4 = inlined_call_operand.hbm [shape: f32[4,1,8], index: 4, kind: input, shape index: {}]
  %s5 = inlined_call_operand.hbm [shape: bf16[4,32,8], index: 5, kind: input, shape index: {}]
  %s6 = inlined_call_operand.hbm [shape: f32[4,1,8], index: 6, kind: input, shape index: {}]
  %s7 = inlined_call_operand.hbm [shape: bf16[4,32,8], index: 7, kind: input, shape index: {}]
  %s8 = inlined_call_operand.hbm [shape: f32[4,1,8], index: 8, kind: input, shape index: {}]
  %s9 = inlined_call_operand.hbm [shape: bf16[4,8,32], index: 9, kind: input, shape index: {}]
  %s10 = inlined_call_operand.hbm [shape: f32[1,32], index: 10, kind: input, shape index: {}]
  %s11 = inlined_call_operand.hbm [shape: f32[2,8,32], index: 11, kind: output, shape index: {}]
  %s12 = sld [smem:[#allocation0]]
  $region129: #{tpu_custom_call.1} parent=0
    _
  %s14 = ssub.s32 1, %s12
  %s15 = scalar_select 0, %s14, %s12
  $region1: #{tpu_custom_call.1} parent=0
    #allocation3 [shape = 'u8[4096]{0}', space=vmem, size = 0x1000, scoped, tag = 'input window, operand 0']
    #allocation4 [shape = 's32[2]{0}', space=sflag, size = 0x8, scoped, tag = 'scoped memory for tpu_custom_call.1']
    #allocation5 [shape = 's32[2]{0}', space=sflag, size = 0x8, scoped, tag = 'scoped memory for tpu_custom_call.1']
    #allocation6 [shape = 'u8[4096]{0}', space=vmem, size = 0x1000, scoped, tag = 'input window, operand 1']
    #allocation7 [shape = 's32[2]{0}', space=sflag, size = 0x8, scoped, tag = 'scoped memory for tpu_custom_call.1']
    #allocation8 [shape = 'u8[4096]{0}', space=vmem, size = 0x1000, scoped, tag = 'input window, operand 2']
    #allocation9 [shape = 'u8[16384]{0}', space=vmem, size = 0x4000, scoped, tag = 'input window, operand 3']
    #allocation10 [shape = 's32[2]{0}', space=sflag, size = 0x8, scoped, tag = 'scoped memory for tpu_custom_call.1']
    #allocation11 [shape = 'u8[1024]{0}', space=vmem, size = 0x400, scoped, tag = 'input window, operand 4']
    #allocation12 [shape = 'u8[16384]{0}', space=vmem, size = 0x4000, scoped, tag = 'input window, operand 5']
    #allocation13 [shape = 's32[2]{0}', space=sflag, size = 0x8, scoped, tag = 'scoped memory for tpu_custom_call.1']
    #allocation14 [shape = 'u8[1024]{0}', space=vmem, size = 0x400, scoped, tag = 'input window, operand 6']
    #allocation15 [shape = 'u8[16384]{0}', space=vmem, size = 0x4000, scoped, tag = 'input window, operand 7']
    #allocation16 [shape = 's32[2]{0}', space=sflag, size = 0x8, scoped, tag = 'scoped memory for tpu_custom_call.1']
    #allocation17 [shape = 'u8[1024]{0}', space=vmem, size = 0x400, scoped, tag = 'input window, operand 8']
    #allocation18 [shape = 'u8[4096]{0}', space=vmem, size = 0x1000, scoped, tag = 'input window, operand 9']
    #allocation19 [shape = 's32[2]{0}', space=sflag, size = 0x8, scoped, tag = 'scoped memory for tpu_custom_call.1']
    #allocation20 [shape = 'u8[512]{0}', space=vmem, size = 0x400, scoped, tag = 'input window, operand 10, single buffered']
    #allocation21 [shape = 'u8[8192]{0}', space=vmem, size = 0x2000, scoped, tag = 'output window, operand 0']
    %16 = vsyncpa [#allocation4], 0
    %s17 = scalar_lea.sflag [#allocation4], 1
    %18 = vsyncpa %s17, 0
    %19 = vsyncpa [#allocation7], 0
    %s20 = scalar_lea.sflag [#allocation7], 1
    %21 = vsyncpa %s20, 0
    %22 = vsyncpa [#allocation10], 0
    %s23 = scalar_lea.sflag [#allocation10], 1
    %24 = vsyncpa %s23, 0
    %25 = vsyncpa [#allocation13], 0
    %s26 = scalar_lea.sflag [#allocation13], 1
    %27 = vsyncpa %s26, 0
    %28 = vsyncpa [#allocation16], 0
    %s29 = scalar_lea.sflag [#allocation16], 1
    %30 = vsyncpa %s29, 0
    %31 = vsyncpa [#allocation19], 0
    %s32 = scalar_lea.sflag [#allocation19], 1
    %33 = vsyncpa %s32, 0
    %34 = vsyncpa [#allocation5], 0
    %s35 = scalar_lea.sflag [#allocation5], 1
    %36 = vsyncpa %s35, 0
    loop: start=0, step=1, limit=10
    $region2: #{tpu_custom_call.1} parent=1 // loop_pre_header
      _
    $region3: #{tpu_custom_call.1} parent=1 // loop_header
      %s38 = sphi 0, %s42
      %p39 = scmp.ge.s32.totalorder %s38, 10
      %s45 = sphi 0, %s64
      %s46 = sphi 0, %s60
      %s47 = sphi 0, %s56
      %s48 = sphi 0, %s45
      %s49 = sphi 0, %s46
      %s50 = sphi 0, %s47
      %s51 = sphi 0, %s48
      %s52 = sphi 0, %s49
      %s53 = sphi 0, %s50
      %s69 = sphi 0, %s71
      %s72 = sphi 0, %s69
      %s73 = sphi 0, %s72
      %s89 = sphi 0, %s73
      %s95 = sphi 0, %s97
      %s98 = sphi 0, %s95
      %s99 = sphi 0, %s98
      %s115 = sphi 0, %s99
      %s121 = sphi 0, %s123
      %s124 = sphi 0, %s121
      %s125 = sphi 0, %s124
      %s141 = sphi 0, %s125
      %s147 = sphi 0, %s149
      %s150 = sphi 0, %s147
      %s151 = sphi 0, %s150
      %s167 = sphi 0, %s151
      %s173 = sphi 0, %s175
      %s176 = sphi 0, %s173
      %s177 = sphi 0, %s176
      %s193 = sphi 0, %s177
      %s199 = sphi 0, %s201
      %s202 = sphi 0, %s199
      %s203 = sphi 0, %s202
      %s219 = sphi 0, %s203
      %s225 = sphi 0, %s227
      %s228 = sphi 0, %s225
      %s229 = sphi 0, %s228
      %s245 = sphi 0, %s229
      %s251 = sphi 0, %s253
      %s254 = sphi 0, %s251
      %s255 = sphi 0, %s254
      %s271 = sphi 0, %s255
      %s277 = sphi 0, %s279
      %s280 = sphi 0, %s277
      %s281 = sphi 0, %s280
      %s297 = sphi 0, %s281
      %s303 = sphi 0, %s305
      %s306 = sphi 0, %s303
      %s307 = sphi 0, %s306
      %s323 = sphi 0, %s307
      %s327 = sphi 0, %s327
      %s329 = sphi 0, %s327
      %s330 = sphi 0, %s329
      %s344 = sphi 0, %s330
      %s352 = sphi 0, %s354
      %s355 = sphi 0, %s352
      %s356 = sphi 0, %s355
      %s372 = sphi 0, %s356
    $region4: #{tpu_custom_call.1} parent=1 // loop_header_branch
      %41 = sbr.rel (%p39) target = $region8
    $region5: #{tpu_custom_call.1} parent=1 // loop_body
      %s43 = ssub.s32 %s38, 1
      %s44 = ssub.s32 %s38, 2
      %s54 = sadd.s32 1, %s47
      %p55 = scmp.ge.s32.totalorder %s54, 4
      %s56 = scalar_select %p55, 0, %s54
      %s57 = sadd.s32 1, %s46
      %s58 = scalar_select %p55, %s57, %s46
      %p59 = scmp.ge.s32.totalorder %s58, 1
      %s60 = scalar_select %p59, 0, %s58
      %s61 = sadd.s32 1, %s45
      %s62 = scalar_select %p59, %s61, %s45
      %p63 = scmp.ge.s32.totalorder %s62, 2
      %s64 = scalar_select %p63, 0, %s62
      %s65 = ssub.s32 %s45, %s64
      %s66 = ssub.s32 %s46, %s60
      %s67 = sor.u32 %s65, %s66
      %p68 = scmp.eq.s32.totalorder %s67, 0
      %s70 = sadd.s32 %s69, 1
      %s71 = scalar_select %p68, %s69, %s70
      %p74 = pneg %p68
      %p75 = scmp.eq.s32.totalorder %s38, 7
      %p76 = por %p74, %p75
      %p77 = scmp.ne.s32.totalorder %s69, %s72
      %p78 = scmp.eq.s32.totalorder %s38, 0
      %p79 = por %p77, %p78
      %p80 = scmp.ne.s32.totalorder %s69, %s72
      %p81 = scmp.eq.s32.totalorder %s43, 7
      %p82 = por %p80, %p81
      %p83 = scmp.ne.s32.totalorder %s72, %s73
      %p84 = scmp.eq.s32.totalorder %s43, 0
      %p85 = por %p83, %p84
      %p86 = scmp.ne.s32.totalorder %s72, %s73
      %p87 = scmp.eq.s32.totalorder %s44, 7
      %p88 = por %p86, %p87
      %p90 = scmp.ne.s32.totalorder %s73, %s89
      %p91 = scmp.eq.s32.totalorder %s44, 0
      %p92 = por %p90, %p91
      %s93 = ssub.s32 %s45, %s64
      %p94 = scmp.eq.s32.totalorder %s93, 0
      %s96 = sadd.s32 %s95, 1
      %s97 = scalar_select %p94, %s95, %s96
      %p100 = pneg %p94
      %p101 = scmp.eq.s32.totalorder %s38, 7
      %p102 = por %p100, %p101
      %p103 = scmp.ne.s32.totalorder %s95, %s98
      %p104 = scmp.eq.s32.totalorder %s38, 0
      %p105 = por %p103, %p104
      %p106 = scmp.ne.s32.totalorder %s95, %s98
      %p107 = scmp.eq.s32.totalorder %s43, 7
      %p108 = por %p106, %p107
      %p109 = scmp.ne.s32.totalorder %s98, %s99
      %p110 = scmp.eq.s32.totalorder %s43, 0
      %p111 = por %p109, %p110
      %p112 = scmp.ne.s32.totalorder %s98, %s99
      %p113 = scmp.eq.s32.totalorder %s44, 7
      %p114 = por %p112, %p113
      %p116 = scmp.ne.s32.totalorder %s99, %s115
      %p117 = scmp.eq.s32.totalorder %s44, 0
      %p118 = por %p116, %p117
      %s119 = ssub.s32 %s45, %s64
      %p120 = scmp.eq.s32.totalorder %s119, 0
      %s122 = sadd.s32 %s121, 1
      %s123 = scalar_select %p120, %s121, %s122
      %p126 = pneg %p120
      %p127 = scmp.eq.s32.totalorder %s38, 7
      %p128 = por %p126, %p127
      %p129 = scmp.ne.s32.totalorder %s121, %s124
      %p130 = scmp.eq.s32.totalorder %s38, 0
      %p131 = por %p129, %p130
      %p132 = scmp.ne.s32.totalorder %s121, %s124
      %p133 = scmp.eq.s32.totalorder %s43, 7
      %p134 = por %p132, %p133
      %p135 = scmp.ne.s32.totalorder %s124, %s125
      %p136 = scmp.eq.s32.totalorder %s43, 0
      %p137 = por %p135, %p136
      %p138 = scmp.ne.s32.totalorder %s124, %s125
      %p139 = scmp.eq.s32.totalorder %s44, 7
      %p140 = por %p138, %p139
      %p142 = scmp.ne.s32.totalorder %s125, %s141
      %p143 = scmp.eq.s32.totalorder %s44, 0
      %p144 = por %p142, %p143
      %s145 = ssub.s32 %s47, %s56
      %p146 = scmp.eq.s32.totalorder %s145, 0
      %s148 = sadd.s32 %s147, 1
      %s149 = scalar_select %p146, %s147, %s148
      %p152 = pneg %p146
      %p153 = scmp.eq.s32.totalorder %s38, 7
      %p154 = por %p152, %p153
      %p155 = scmp.ne.s32.totalorder %s147, %s150
      %p156 = scmp.eq.s32.totalorder %s38, 0
      %p157 = por %p155, %p156
      %p158 = scmp.ne.s32.totalorder %s147, %s150
      %p159 = scmp.eq.s32.totalorder %s43, 7
      %p160 = por %p158, %p159
      %p161 = scmp.ne.s32.totalorder %s150, %s151
      %p162 = scmp.eq.s32.totalorder %s43, 0
      %p163 = por %p161, %p162
      %p164 = scmp.ne.s32.totalorder %s150, %s151
      %p165 = scmp.eq.s32.totalorder %s44, 7
      %p166 = por %p164, %p165
      %p168 = scmp.ne.s32.totalorder %s151, %s167
      %p169 = scmp.eq.s32.totalorder %s44, 0
      %p170 = por %p168, %p169
      %s171 = ssub.s32 %s47, %s56
      %p172 = scmp.eq.s32.totalorder %s171, 0
      %s174 = sadd.s32 %s173, 1
      %s175 = scalar_select %p172, %s173, %s174
      %p178 = pneg %p172
      %p179 = scmp.eq.s32.totalorder %s38, 7
      %p180 = por %p178, %p179
      %p181 = scmp.ne.s32.totalorder %s173, %s176
      %p182 = scmp.eq.s32.totalorder %s38, 0
      %p183 = por %p181, %p182
      %p184 = scmp.ne.s32.totalorder %s173, %s176
      %p185 = scmp.eq.s32.totalorder %s43, 7
      %p186 = por %p184, %p185
      %p187 = scmp.ne.s32.totalorder %s176, %s177
      %p188 = scmp.eq.s32.totalorder %s43, 0
      %p189 = por %p187, %p188
      %p190 = scmp.ne.s32.totalorder %s176, %s177
      %p191 = scmp.eq.s32.totalorder %s44, 7
      %p192 = por %p190, %p191
      %p194 = scmp.ne.s32.totalorder %s177, %s193
      %p195 = scmp.eq.s32.totalorder %s44, 0
      %p196 = por %p194, %p195
      %s197 = ssub.s32 %s47, %s56
      %p198 = scmp.eq.s32.totalorder %s197, 0
      %s200 = sadd.s32 %s199, 1
      %s201 = scalar_select %p198, %s199, %s200
      %p204 = pneg %p198
      %p205 = scmp.eq.s32.totalorder %s38, 7
      %p206 = por %p204, %p205
      %p207 = scmp.ne.s32.totalorder %s199, %s202
      %p208 = scmp.eq.s32.totalorder %s38, 0
      %p209 = por %p207, %p208
      %p210 = scmp.ne.s32.totalorder %s199, %s202
      %p211 = scmp.eq.s32.totalorder %s43, 7
      %p212 = por %p210, %p211
      %p213 = scmp.ne.s32.totalorder %s202, %s203
      %p214 = scmp.eq.s32.totalorder %s43, 0
      %p215 = por %p213, %p214
      %p216 = scmp.ne.s32.totalorder %s202, %s203
      %p217 = scmp.eq.s32.totalorder %s44, 7
      %p218 = por %p216, %p217
      %p220 = scmp.ne.s32.totalorder %s203, %s219
      %p221 = scmp.eq.s32.totalorder %s44, 0
      %p222 = por %p220, %p221
      %s223 = ssub.s32 %s47, %s56
      %p224 = scmp.eq.s32.totalorder %s223, 0
      %s226 = sadd.s32 %s225, 1
      %s227 = scalar_select %p224, %s225, %s226
      %p230 = pneg %p224
      %p231 = scmp.eq.s32.totalorder %s38, 7
      %p232 = por %p230, %p231
      %p233 = scmp.ne.s32.totalorder %s225, %s228
      %p234 = scmp.eq.s32.totalorder %s38, 0
      %p235 = por %p233, %p234
      %p236 = scmp.ne.s32.totalorder %s225, %s228
      %p237 = scmp.eq.s32.totalorder %s43, 7
      %p238 = por %p236, %p237
      %p239 = scmp.ne.s32.totalorder %s228, %s229
      %p240 = scmp.eq.s32.totalorder %s43, 0
      %p241 = por %p239, %p240
      %p242 = scmp.ne.s32.totalorder %s228, %s229
      %p243 = scmp.eq.s32.totalorder %s44, 7
      %p244 = por %p242, %p243
      %p246 = scmp.ne.s32.totalorder %s229, %s245
      %p247 = scmp.eq.s32.totalorder %s44, 0
      %p248 = por %p246, %p247
      %s249 = ssub.s32 %s47, %s56
      %p250 = scmp.eq.s32.totalorder %s249, 0
      %s252 = sadd.s32 %s251, 1
      %s253 = scalar_select %p250, %s251, %s252
      %p256 = pneg %p250
      %p257 = scmp.eq.s32.totalorder %s38, 7
      %p258 = por %p256, %p257
      %p259 = scmp.ne.s32.totalorder %s251, %s254
      %p260 = scmp.eq.s32.totalorder %s38, 0
      %p261 = por %p259, %p260
      %p262 = scmp.ne.s32.totalorder %s251, %s254
      %p263 = scmp.eq.s32.totalorder %s43, 7
      %p264 = por %p262, %p263
      %p265 = scmp.ne.s32.totalorder %s254, %s255
      %p266 = scmp.eq.s32.totalorder %s43, 0
      %p267 = por %p265, %p266
      %p268 = scmp.ne.s32.totalorder %s254, %s255
      %p269 = scmp.eq.s32.totalorder %s44, 7
      %p270 = por %p268, %p269
      %p272 = scmp.ne.s32.totalorder %s255, %s271
      %p273 = scmp.eq.s32.totalorder %s44, 0
      %p274 = por %p272, %p273
      %s275 = ssub.s32 %s47, %s56
      %p276 = scmp.eq.s32.totalorder %s275, 0
      %s278 = sadd.s32 %s277, 1
      %s279 = scalar_select %p276, %s277, %s278
      %p282 = pneg %p276
      %p283 = scmp.eq.s32.totalorder %s38, 7
      %p284 = por %p282, %p283
      %p285 = scmp.ne.s32.totalorder %s277, %s280
      %p286 = scmp.eq.s32.totalorder %s38, 0
      %p287 = por %p285, %p286
      %p288 = scmp.ne.s32.totalorder %s277, %s280
      %p289 = scmp.eq.s32.totalorder %s43, 7
      %p290 = por %p288, %p289
      %p291 = scmp.ne.s32.totalorder %s280, %s281
      %p292 = scmp.eq.s32.totalorder %s43, 0
      %p293 = por %p291, %p292
      %p294 = scmp.ne.s32.totalorder %s280, %s281
      %p295 = scmp.eq.s32.totalorder %s44, 7
      %p296 = por %p294, %p295
      %p298 = scmp.ne.s32.totalorder %s281, %s297
      %p299 = scmp.eq.s32.totalorder %s44, 0
      %p300 = por %p298, %p299
      %s301 = ssub.s32 %s47, %s56
      %p302 = scmp.eq.s32.totalorder %s301, 0
      %s304 = sadd.s32 %s303, 1
      %s305 = scalar_select %p302, %s303, %s304
      %p308 = pneg %p302
      %p309 = scmp.eq.s32.totalorder %s38, 7
      %p310 = por %p308, %p309
      %p311 = scmp.ne.s32.totalorder %s303, %s306
      %p312 = scmp.eq.s32.totalorder %s38, 0
      %p313 = por %p311, %p312
      %p314 = scmp.ne.s32.totalorder %s303, %s306
      %p315 = scmp.eq.s32.totalorder %s43, 7
      %p316 = por %p314, %p315
      %p317 = scmp.ne.s32.totalorder %s306, %s307
      %p318 = scmp.eq.s32.totalorder %s43, 0
      %p319 = por %p317, %p318
      %p320 = scmp.ne.s32.totalorder %s306, %s307
      %p321 = scmp.eq.s32.totalorder %s44, 7
      %p322 = por %p320, %p321
      %p324 = scmp.ne.s32.totalorder %s307, %s323
      %p325 = scmp.eq.s32.totalorder %s44, 0
      %p326 = por %p324, %p325
      %s328 = sadd.s32 %s327, 1
      %p331 = scmp.eq.s32.totalorder %s38, 7
      %p332 = scmp.ne.s32.totalorder %s327, %s329
      %p333 = scmp.eq.s32.totalorder %s38, 0
      %p334 = por %p332, %p333
      %p335 = scmp.ne.s32.totalorder %s327, %s329
      %p336 = scmp.eq.s32.totalorder %s43, 7
      %p337 = por %p335, %p336
      %p338 = scmp.ne.s32.totalorder %s329, %s330
      %p339 = scmp.eq.s32.totalorder %s43, 0
      %p340 = por %p338, %p339
      %p341 = scmp.ne.s32.totalorder %s329, %s330
      %p342 = scmp.eq.s32.totalorder %s44, 7
      %p343 = por %p341, %p342
      %p345 = scmp.ne.s32.totalorder %s330, %s344
      %p346 = scmp.eq.s32.totalorder %s44, 0
      %p347 = por %p345, %p346
      %s348 = ssub.s32 %s45, %s64
      %s349 = ssub.s32 %s46, %s60
      %s350 = sor.u32 %s348, %s349
      %p351 = scmp.eq.s32.totalorder %s350, 0
      %s353 = sadd.s32 %s352, 1
      %s354 = scalar_select %p351, %s352, %s353
      %p357 = pneg %p351
      %p358 = scmp.eq.s32.totalorder %s38, 7
      %p359 = por %p357, %p358
      %p360 = scmp.ne.s32.totalorder %s352, %s355
      %p361 = scmp.eq.s32.totalorder %s38, 0
      %p362 = por %p360, %p361
      %p363 = scmp.ne.s32.totalorder %s352, %s355
      %p364 = scmp.eq.s32.totalorder %s43, 7
      %p365 = por %p363, %p364
      %p366 = scmp.ne.s32.totalorder %s355, %s356
      %p367 = scmp.eq.s32.totalorder %s43, 0
      %p368 = por %p366, %p367
      %p369 = scmp.ne.s32.totalorder %s355, %s356
      %p370 = scmp.eq.s32.totalorder %s44, 7
      %p371 = por %p369, %p370
      %p373 = scmp.ne.s32.totalorder %s356, %s372
      %p374 = scmp.eq.s32.totalorder %s44, 0
      %p375 = por %p373, %p374
      %p376 = scmp.le.s32.totalorder 1, %s38
      %p377 = scmp.lt.s32.totalorder %s38, 9
      %p378 = pnand %p376, %p377
      %p379 = pneg %p378
      // Predicated region
      $region9: #{tpu_custom_call.1} parent=5 // pred_check
        _
      $region10: #{tpu_custom_call.1} parent=5 // pred_check_branch
        %381 = sbr.rel (%p378) target = $region12
      $region11: #{tpu_custom_call.1} parent=5 // pred_region
        %s382 = ssub.s32 %s38, 1
        // Predicated region
        $region13: #{tpu_custom_call.1} parent=11 // pred_check
          %p383 = pneg %p340
        $region14: #{tpu_custom_call.1} parent=11 // pred_check_branch
          %385 = sbr.rel (%p383) target = $region16
        $region15: #{tpu_custom_call.1} parent=11 // pred_region
          %s387 = ssub.s32 16, 16
          %388 = vsyncadd [#allocation19], %s387
          %s390 = sshll.u32 [#allocation20], 4
          %s391 = int_to_ptr.vmem [resolvable:$true] %s390
          %393 = dma.hbm_to_vmem [thread:$0]  %s10, 16, %s391, [#allocation19]
        $region16: #{tpu_custom_call.1} parent=11 // pred_fallthru
          _
      $region12: #{tpu_custom_call.1} parent=5 // pred_fallthru
        _
      %p394 = scmp.lt.s32.totalorder %s38, 8
      // Predicated region
      $region17: #{tpu_custom_call.1} parent=5 // pred_check
        %p395 = pneg %p394
      $region18: #{tpu_custom_call.1} parent=5 // pred_check_branch
        %397 = sbr.rel (%p395) target = $region20
      $region19: #{tpu_custom_call.1} parent=5 // pred_region
        // Predicated region
        $region21: #{tpu_custom_call.1} parent=19 // pred_check
          %p398 = pneg %p79
        $region22: #{tpu_custom_call.1} parent=19 // pred_check_branch
          %400 = sbr.rel (%p398) target = $region24
        $region23: #{tpu_custom_call.1} parent=19 // pred_region
          %s401 = sand.u32 %s69, 1
          %s402 = scalar_lea.sflag [#allocation4], %s401
          %s403 = sand.u32 %s69, 1
          %s404 = smul.addr %s403, 4
          %s405 = scalar_lea.vmem [#allocation3], %s404
          %s407 = ssub.s32 64, 64
          %408 = vsyncadd %s402, %s407
          %s409 = sadd.s32 %s46, %s45
          %s410 = smul.addr %s409, 64
          %s411 = scalar_lea.hbm %s0, %s410
          %s413 = sshll.u32 %s405, 4
          %s414 = int_to_ptr.vmem [resolvable:$true] %s413
          %416 = dma.hbm_to_vmem [thread:$0]  %s411, 64, %s414, %s402
        $region24: #{tpu_custom_call.1} parent=19 // pred_fallthru
          _
        // Predicated region
        $region25: #{tpu_custom_call.1} parent=19 // pred_check
          %p417 = pneg %p105
        $region26: #{tpu_custom_call.1} parent=19 // pred_check_branch
          %419 = sbr.rel (%p417) target = $region28
        $region27: #{tpu_custom_call.1} parent=19 // pred_region
          %s420 = sand.u32 %s38, 1
          %s421 = scalar_lea.sflag [#allocation7], %s420
          %s422 = sand.u32 %s95, 1
          %s423 = smul.addr %s422, 4
          %s424 = scalar_lea.vmem [#allocation6], %s423
          %s426 = ssub.s32 64, 64
          %427 = vsyncadd %s421, %s426
          %s428 = smul.addr %s45, 64
          %s429 = scalar_lea.hbm %s1, %s428
          %s431 = sshll.u32 %s424, 4
          %s432 = int_to_ptr.vmem [resolvable:$true] %s431
          %434 = dma.hbm_to_vmem [thread:$0]  %s429, 64, %s432, %s421
        $region28: #{tpu_custom_call.1} parent=19 // pred_fallthru
          _
        // Predicated region
        $region29: #{tpu_custom_call.1} parent=19 // pred_check
          %p435 = pneg %p131
        $region30: #{tpu_custom_call.1} parent=19 // pred_check_branch
          %437 = sbr.rel (%p435) target = $region32
        $region31: #{tpu_custom_call.1} parent=19 // pred_region
          %s438 = sand.u32 %s38, 1
          %s439 = scalar_lea.sflag [#allocation7], %s438
          %s440 = sand.u32 %s121, 1
          %s441 = smul.addr %s440, 4
          %s442 = scalar_lea.vmem [#allocation8], %s441
          %s444 = ssub.s32 64, 64
          %445 = vsyncadd %s439, %s444
          %s446 = smul.addr %s45, 64
          %s447 = scalar_lea.hbm %s2, %s446
          %s449 = sshll.u32 %s442, 4
          %s450 = int_to_ptr.vmem [resolvable:$true] %s449
          %452 = dma.hbm_to_vmem [thread:$0]  %s447, 64, %s450, %s439
        $region32: #{tpu_custom_call.1} parent=19 // pred_fallthru
          _
        // Predicated region
        $region33: #{tpu_custom_call.1} parent=19 // pred_check
          %p453 = pneg %p157
        $region34: #{tpu_custom_call.1} parent=19 // pred_check_branch
          %455 = sbr.rel (%p453) target = $region36
        $region35: #{tpu_custom_call.1} parent=19 // pred_region
          %s456 = sand.u32 %s38, 1
          %s457 = scalar_lea.sflag [#allocation10], %s456
          %s458 = sand.u32 %s147, 1
          %s459 = smul.addr %s458, 16
          %s460 = scalar_lea.vmem [#allocation9], %s459
          %s462 = ssub.s32 256, 256
          %463 = vsyncadd %s457, %s462
          %s464 = smul.addr %s47, 4
          %s465 = smul.addr %s464, 64
          %s466 = scalar_lea.hbm %s3, %s465
          %s467 = sshll.u32 %s460, 4
          %s468 = int_to_ptr.vmem [resolvable:$true] %s467
          %473 = dma.hbm_to_vmem [thread:$0]  %s466, 256, %s468, %s457, 64, 64, 4
        $region36: #{tpu_custom_call.1} parent=19 // pred_fallthru
          _
        // Predicated region
        $region37: #{tpu_custom_call.1} parent=19 // pred_check
          %p474 = pneg %p183
        $region38: #{tpu_custom_call.1} parent=19 // pred_check_branch
          %476 = sbr.rel (%p474) target = $region40
        $region39: #{tpu_custom_call.1} parent=19 // pred_region
          %s477 = sand.u32 %s38, 1
          %s478 = scalar_lea.sflag [#allocation10], %s477
          %s479 = sand.u32 %s173, 1
          %s480 = scalar_lea.vmem [#allocation11], %s479
          %s482 = ssub.s32 16, 16
          %483 = vsyncadd %s478, %s482
          %s484 = smul.addr %s47, 16
          %s485 = scalar_lea.hbm %s4, %s484
          %s487 = sshll.u32 %s480, 4
          %s488 = int_to_ptr.vmem [resolvable:$true] %s487
          %490 = dma.hbm_to_vmem [thread:$0]  %s485, 16, %s488, %s478
        $region40: #{tpu_custom_call.1} parent=19 // pred_fallthru
          _
        // Predicated region
        $region41: #{tpu_custom_call.1} parent=19 // pred_check
          %p491 = pneg %p209
        $region42: #{tpu_custom_call.1} parent=19 // pred_check_branch
          %493 = sbr.rel (%p491) target = $region44
        $region43: #{tpu_custom_call.1} parent=19 // pred_region
          %s494 = sand.u32 %s38, 1
          %s495 = scalar_lea.sflag [#allocation13], %s494
          %s496 = sand.u32 %s199, 1
          %s497 = smul.addr %s496, 16
          %s498 = scalar_lea.vmem [#allocation12], %s497
          %s500 = ssub.s32 256, 256
          %501 = vsyncadd %s495, %s500
          %s502 = smul.addr %s47, 4
          %s503 = smul.addr %s502, 64
          %s504 = scalar_lea.hbm %s5, %s503
          %s505 = sshll.u32 %s498, 4
          %s506 = int_to_ptr.vmem [resolvable:$true] %s505
          %511 = dma.hbm_to_vmem [thread:$0]  %s504, 256, %s506, %s495, 64, 64, 4
        $region44: #{tpu_custom_call.1} parent=19 // pred_fallthru
          _
        // Predicated region
        $region45: #{tpu_custom_call.1} parent=19 // pred_check
          %p512 = pneg %p235
        $region46: #{tpu_custom_call.1} parent=19 // pred_check_branch
          %514 = sbr.rel (%p512) target = $region48
        $region47: #{tpu_custom_call.1} parent=19 // pred_region
          %s515 = sand.u32 %s38, 1
          %s516 = scalar_lea.sflag [#allocation13], %s515
          %s517 = sand.u32 %s225, 1
          %s518 = scalar_lea.vmem [#allocation14], %s517
          %s520 = ssub.s32 16, 16
          %521 = vsyncadd %s516, %s520
          %s522 = smul.addr %s47, 16
          %s523 = scalar_lea.hbm %s6, %s522
          %s525 = sshll.u32 %s518, 4
          %s526 = int_to_ptr.vmem [resolvable:$true] %s525
          %528 = dma.hbm_to_vmem [thread:$0]  %s523, 16, %s526, %s516
        $region48: #{tpu_custom_call.1} parent=19 // pred_fallthru
          _
        // Predicated region
        $region49: #{tpu_custom_call.1} parent=19 // pred_check
          %p529 = pneg %p261
        $region50: #{tpu_custom_call.1} parent=19 // pred_check_branch
          %531 = sbr.rel (%p529) target = $region52
        $region51: #{tpu_custom_call.1} parent=19 // pred_region
          %s532 = sand.u32 %s38, 1
          %s533 = scalar_lea.sflag [#allocation16], %s532
          %s534 = sand.u32 %s251, 1
          %s535 = smul.addr %s534, 16
          %s536 = scalar_lea.vmem [#allocation15], %s535
          %s538 = ssub.s32 256, 256
          %539 = vsyncadd %s533, %s538
          %s540 = smul.addr %s47, 4
          %s541 = smul.addr %s540, 64
          %s542 = scalar_lea.hbm %s7, %s541
          %s543 = sshll.u32 %s536, 4
          %s544 = int_to_ptr.vmem [resolvable:$true] %s543
          %549 = dma.hbm_to_vmem [thread:$0]  %s542, 256, %s544, %s533, 64, 64, 4
        $region52: #{tpu_custom_call.1} parent=19 // pred_fallthru
          _
        // Predicated region
        $region53: #{tpu_custom_call.1} parent=19 // pred_check
          %p550 = pneg %p287
        $region54: #{tpu_custom_call.1} parent=19 // pred_check_branch
          %552 = sbr.rel (%p550) target = $region56
        $region55: #{tpu_custom_call.1} parent=19 // pred_region
          %s553 = sand.u32 %s38, 1
          %s554 = scalar_lea.sflag [#allocation16], %s553
          %s555 = sand.u32 %s277, 1
          %s556 = scalar_lea.vmem [#allocation17], %s555
          %s558 = ssub.s32 16, 16
          %559 = vsyncadd %s554, %s558
          %s560 = smul.addr %s47, 16
          %s561 = scalar_lea.hbm %s8, %s560
          %s563 = sshll.u32 %s556, 4
          %s564 = int_to_ptr.vmem [resolvable:$true] %s563
          %566 = dma.hbm_to_vmem [thread:$0]  %s561, 16, %s564, %s554
        $region56: #{tpu_custom_call.1} parent=19 // pred_fallthru
          _
        // Predicated region
        $region57: #{tpu_custom_call.1} parent=19 // pred_check
          %p567 = pneg %p313
        $region58: #{tpu_custom_call.1} parent=19 // pred_check_branch
          %569 = sbr.rel (%p567) target = $region60
        $region59: #{tpu_custom_call.1} parent=19 // pred_region
          %s570 = sand.u32 %s38, 1
          %s571 = scalar_lea.sflag [#allocation19], %s570
          %s572 = sand.u32 %s303, 1
          %s573 = smul.addr %s572, 4
          %s574 = scalar_lea.vmem [#allocation18], %s573
          %s576 = ssub.s32 64, 64
          %577 = vsyncadd %s571, %s576
          %s578 = smul.addr %s47, 64
          %s579 = scalar_lea.hbm %s9, %s578
          %s581 = sshll.u32 %s574, 4
          %s582 = int_to_ptr.vmem [resolvable:$true] %s581
          %584 = dma.hbm_to_vmem [thread:$0]  %s579, 64, %s582, %s571
        $region60: #{tpu_custom_call.1} parent=19 // pred_fallthru
          _
      $region20: #{tpu_custom_call.1} parent=5 // pred_fallthru
        _
      %p585 = scmp.le.s32.totalorder 1, %s38
      %p586 = scmp.lt.s32.totalorder %s38, 9
      %p587 = pnand %p585, %p586
      %p588 = pneg %p587
      // Predicated region
      $region61: #{tpu_custom_call.1} parent=5 // pred_check
        _
      $region62: #{tpu_custom_call.1} parent=5 // pred_check_branch
        %590 = sbr.rel (%p587) target = $region64
      $region63: #{tpu_custom_call.1} parent=5 // pred_region
        %s591 = ssub.s32 %s38, 1
        %s592 = sand.u32 %s72, 1
        %s593 = scalar_lea.sflag [#allocation4], %s592
        %s594 = sand.u32 %s72, 1
        %s595 = smul.addr %s594, 4
        %s596 = scalar_lea.vmem [#allocation3], %s595
        // Predicated region
        $region65: #{tpu_custom_call.1} parent=63 // pred_check
          %p597 = pneg %p85
        $region66: #{tpu_custom_call.1} parent=63 // pred_check_branch
          %599 = sbr.rel (%p597) target = $region68
        $region67: #{tpu_custom_call.1} parent=63 // pred_region
          %600 = dma.done %s593, 64
        $region68: #{tpu_custom_call.1} parent=63 // pred_fallthru
          _
        %s601 = sand.u32 %s43, 1
        %s602 = scalar_lea.sflag [#allocation7], %s601
        %s603 = sand.u32 %s98, 1
        %s604 = smul.addr %s603, 4
        %s605 = scalar_lea.vmem [#allocation6], %s604
        // Predicated region
        $region69: #{tpu_custom_call.1} parent=63 // pred_check
          %p606 = pneg %p111
        $region70: #{tpu_custom_call.1} parent=63 // pred_check_branch
          %608 = sbr.rel (%p606) target = $region72
        $region71: #{tpu_custom_call.1} parent=63 // pred_region
          %609 = dma.done %s602, 64
        $region72: #{tpu_custom_call.1} parent=63 // pred_fallthru
          _
        %s610 = sand.u32 %s43, 1
        %s611 = scalar_lea.sflag [#allocation7], %s610
        %s612 = sand.u32 %s124, 1
        %s613 = smul.addr %s612, 4
        %s614 = scalar_lea.vmem [#allocation8], %s613
        // Predicated region
        $region73: #{tpu_custom_call.1} parent=63 // pred_check
          %p615 = pneg %p137
        $region74: #{tpu_custom_call.1} parent=63 // pred_check_branch
          %617 = sbr.rel (%p615) target = $region76
        $region75: #{tpu_custom_call.1} parent=63 // pred_region
          %618 = dma.done %s611, 64
        $region76: #{tpu_custom_call.1} parent=63 // pred_fallthru
          _
        %s619 = sand.u32 %s43, 1
        %s620 = scalar_lea.sflag [#allocation10], %s619
        %s621 = sand.u32 %s150, 1
        %s622 = smul.addr %s621, 16
        %s623 = scalar_lea.vmem [#allocation9], %s622
        // Predicated region
        $region77: #{tpu_custom_call.1} parent=63 // pred_check
          %p624 = pneg %p163
        $region78: #{tpu_custom_call.1} parent=63 // pred_check_branch
          %626 = sbr.rel (%p624) target = $region80
        $region79: #{tpu_custom_call.1} parent=63 // pred_region
          %627 = dma.done %s620, 256
        $region80: #{tpu_custom_call.1} parent=63 // pred_fallthru
          _
        %s628 = sand.u32 %s43, 1
        %s629 = scalar_lea.sflag [#allocation10], %s628
        %s630 = sand.u32 %s176, 1
        %s631 = scalar_lea.vmem [#allocation11], %s630
        // Predicated region
        $region81: #{tpu_custom_call.1} parent=63 // pred_check
          %p632 = pneg %p189
        $region82: #{tpu_custom_call.1} parent=63 // pred_check_branch
          %634 = sbr.rel (%p632) target = $region84
        $region83: #{tpu_custom_call.1} parent=63 // pred_region
          %635 = dma.done %s629, 16
        $region84: #{tpu_custom_call.1} parent=63 // pred_fallthru
          _
        %s636 = sand.u32 %s43, 1
        %s637 = scalar_lea.sflag [#allocation13], %s636
        %s638 = sand.u32 %s202, 1
        %s639 = smul.addr %s638, 16
        %s640 = scalar_lea.vmem [#allocation12], %s639
        // Predicated region
        $region85: #{tpu_custom_call.1} parent=63 // pred_check
          %p641 = pneg %p215
        $region86: #{tpu_custom_call.1} parent=63 // pred_check_branch
          %643 = sbr.rel (%p641) target = $region88
        $region87: #{tpu_custom_call.1} parent=63 // pred_region
          %644 = dma.done %s637, 256
        $region88: #{tpu_custom_call.1} parent=63 // pred_fallthru
          _
        %s645 = sand.u32 %s43, 1
        %s646 = scalar_lea.sflag [#allocation13], %s645
        %s647 = sand.u32 %s228, 1
        %s648 = scalar_lea.vmem [#allocation14], %s647
        // Predicated region
        $region89: #{tpu_custom_call.1} parent=63 // pred_check
          %p649 = pneg %p241
        $region90: #{tpu_custom_call.1} parent=63 // pred_check_branch
          %651 = sbr.rel (%p649) target = $region92
        $region91: #{tpu_custom_call.1} parent=63 // pred_region
          %652 = dma.done %s646, 16
        $region92: #{tpu_custom_call.1} parent=63 // pred_fallthru
          _
        %s653 = sand.u32 %s43, 1
        %s654 = scalar_lea.sflag [#allocation16], %s653
        %s655 = sand.u32 %s254, 1
        %s656 = smul.addr %s655, 16
        %s657 = scalar_lea.vmem [#allocation15], %s656
        // Predicated region
        $region93: #{tpu_custom_call.1} parent=63 // pred_check
          %p658 = pneg %p267
        $region94: #{tpu_custom_call.1} parent=63 // pred_check_branch
          %660 = sbr.rel (%p658) target = $region96
        $region95: #{tpu_custom_call.1} parent=63 // pred_region
          %661 = dma.done %s654, 256
        $region96: #{tpu_custom_call.1} parent=63 // pred_fallthru
          _
        %s662 = sand.u32 %s43, 1
        %s663 = scalar_lea.sflag [#allocation16], %s662
        %s664 = sand.u32 %s280, 1
        %s665 = scalar_lea.vmem [#allocation17], %s664
        // Predicated region
        $region97: #{tpu_custom_call.1} parent=63 // pred_check
          %p666 = pneg %p293
        $region98: #{tpu_custom_call.1} parent=63 // pred_check_branch
          %668 = sbr.rel (%p666) target = $region100
        $region99: #{tpu_custom_call.1} parent=63 // pred_region
          %669 = dma.done %s663, 16
        $region100: #{tpu_custom_call.1} parent=63 // pred_fallthru
          _
        %s670 = sand.u32 %s43, 1
        %s671 = scalar_lea.sflag [#allocation19], %s670
        %s672 = sand.u32 %s306, 1
        %s673 = smul.addr %s672, 4
        %s674 = scalar_lea.vmem [#allocation18], %s673
        // Predicated region
        $region101: #{tpu_custom_call.1} parent=63 // pred_check
          %p675 = pneg %p319
        $region102: #{tpu_custom_call.1} parent=63 // pred_check_branch
          %677 = sbr.rel (%p675) target = $region104
        $region103: #{tpu_custom_call.1} parent=63 // pred_region
          %678 = dma.done %s671, 64
        $region104: #{tpu_custom_call.1} parent=63 // pred_fallthru
          _
        // Predicated region
        $region105: #{tpu_custom_call.1} parent=63 // pred_check
          %p679 = pneg %p340
        $region106: #{tpu_custom_call.1} parent=63 // pred_check_branch
          %681 = sbr.rel (%p679) target = $region108
        $region107: #{tpu_custom_call.1} parent=63 // pred_region
          %682 = dma.done [#allocation19], 16
        $region108: #{tpu_custom_call.1} parent=63 // pred_fallthru
          _
        %s683 = sand.u32 %s72, 1
        %s684 = scalar_lea.sflag [#allocation4], %s683
        %s685 = sand.u32 %s72, 1
        %s686 = smul.addr %s685, 4
        %s687 = scalar_lea.vmem [#allocation3], %s686
        %p688 = pneg %p85
        %p689 = pneg %p82
        %s690 = sand.u32 %s43, 1
        %s691 = scalar_lea.sflag [#allocation7], %s690
        %s692 = sand.u32 %s98, 1
        %s693 = smul.addr %s692, 4
        %s694 = scalar_lea.vmem [#allocation6], %s693
        %p695 = pneg %p111
        %p696 = pneg %p108
        %s697 = sand.u32 %s43, 1
        %s698 = scalar_lea.sflag [#allocation7], %s697
        %s699 = sand.u32 %s124, 1
        %s700 = smul.addr %s699, 4
        %s701 = scalar_lea.vmem [#allocation8], %s700
        %p702 = pneg %p137
        %p703 = pneg %p134
        %s704 = sand.u32 %s43, 1
        %s705 = scalar_lea.sflag [#allocation10], %s704
        %s706 = sand.u32 %s150, 1
        %s707 = smul.addr %s706, 16
        %s708 = scalar_lea.vmem [#allocation9], %s707
        %p709 = pneg %p163
        %p710 = pneg %p160
        %s711 = sand.u32 %s43, 1
        %s712 = scalar_lea.sflag [#allocation10], %s711
        %s713 = sand.u32 %s176, 1
        %s714 = scalar_lea.vmem [#allocation11], %s713
        %p715 = pneg %p189
        %p716 = pneg %p186
        %s717 = sand.u32 %s43, 1
        %s718 = scalar_lea.sflag [#allocation13], %s717
        %s719 = sand.u32 %s202, 1
        %s720 = smul.addr %s719, 16
        %s721 = scalar_lea.vmem [#allocation12], %s720
        %p722 = pneg %p215
        %p723 = pneg %p212
        %s724 = sand.u32 %s43, 1
        %s725 = scalar_lea.sflag [#allocation13], %s724
        %s726 = sand.u32 %s228, 1
        %s727 = scalar_lea.vmem [#allocation14], %s726
        %p728 = pneg %p241
        %p729 = pneg %p238
        %s730 = sand.u32 %s43, 1
        %s731 = scalar_lea.sflag [#allocation16], %s730
        %s732 = sand.u32 %s254, 1
        %s733 = smul.addr %s732, 16
        %s734 = scalar_lea.vmem [#allocation15], %s733
        %p735 = pneg %p267
        %p736 = pneg %p264
        %s737 = sand.u32 %s43, 1
        %s738 = scalar_lea.sflag [#allocation16], %s737
        %s739 = sand.u32 %s280, 1
        %s740 = scalar_lea.vmem [#allocation17], %s739
        %p741 = pneg %p293
        %p742 = pneg %p290
        %s743 = sand.u32 %s43, 1
        %s744 = scalar_lea.sflag [#allocation19], %s743
        %s745 = sand.u32 %s306, 1
        %s746 = smul.addr %s745, 4
        %s747 = scalar_lea.vmem [#allocation18], %s746
        %p748 = pneg %p319
        %p749 = pneg %p316
        %p750 = pneg %p340
        %p751 = pneg %p337
        %p752 = pneg %p368
        %p753 = pneg %p365
        %s754 = sand.u32 %s355, 1
        %s755 = scalar_lea.sflag [#allocation5], %s754
        %s756 = sand.u32 %s355, 1
        %s757 = smul.addr %s756, 8
        %s758 = scalar_lea.vmem [#allocation21], %s757
        %p760 = scmp.eq.s32.totalorder %s50, 0
        // Predicated region
        $region109: #{tpu_custom_call.1} parent=63 // pred_check
          %p761 = pneg %p760
        $region110: #{tpu_custom_call.1} parent=63 // pred_check_branch
          %763 = sbr.rel (%p761) target = $region112
        $region111: #{tpu_custom_call.1} parent=63 // pred_region
          %vm764 = vcmask 261120
          %765 = vst.msk [vmem:[#allocation2] sm:$0xff] %vm764, 0.0
        $region112: #{tpu_custom_call.1} parent=63 // pred_fallthru
          _
        %v766 = vld [vmem:[%s596] sm:$0xf]
        %v767 = vld [vmem:[%s605] sm:$0xf]
        %v768 = vld [vmem:[%s614] sm:$0xf]
        %v769 = vld [vmem:[%s623] sm:$0xf]
        %v770 = vld [vmem:[%s623 + $0x4] sm:$0xf]
        %v771 = vld [vmem:[%s623 + $0x8] sm:$0xf]
        %v772 = vld [vmem:[%s623 + $0xc] sm:$0xf]
        %v773 = vld [vmem:[%s640] sm:$0xf]
        %v774 = vld [vmem:[%s640 + $0x4] sm:$0xf]
        %v775 = vld [vmem:[%s640 + $0x8] sm:$0xf]
        %v776 = vld [vmem:[%s640 + $0xc] sm:$0xf]
        %v777 = vld [vmem:[%s657] sm:$0xf]
        %v778 = vld [vmem:[%s657 + $0x4] sm:$0xf]
        %v779 = vld [vmem:[%s657 + $0x8] sm:$0xf]
        %v780 = vld [vmem:[%s657 + $0xc] sm:$0xf]
        %v781 = vld [vmem:[%s674] sm:$0xf]
        %v782 = vld [vmem:[%s631] sm:$0x1]
        %v784 = vlaneseq
        %v785 = vshrl.u32 %v784, 7
        %v786 = vsub.s32 0, %v785
        %v787 = vrot.slane %v782, %v786
        %v793 = vunpack.c.l.b16 %v769
        %v794 = vunpack.c.l.b16 %v770
        %v795 = vunpack.c.l.b16 %v771
        %v796 = vunpack.c.l.b16 %v772
        %v797 = vpack.c.b16 %v794, %v793
        %v798 = vpack.c.b16 %v796, %v795
        %vm801 = vcmask 261120
        %v803 = vsel %vm801, %v766, 0
        %805 = vmatprep.subr.bf16.mxu0 0
        %806 = vmatpush1.bf16.msra.mxu0 %v797
        %807 = vmatprep.subr.bf16.mxu0 0
        %808 = vmatpush1.bf16.msra.mxu0 %v798
        %809 = vmatprep.subr.bf16.mxu0 0
        %810 = vmatpush1.bf16.msra.mxu0 0
        %811 = vmatprep.subr.bf16.mxu0 0
        %812 = vmatpush1.bf16.msra.mxu0 0
        %813 = vmatprep.subr.bf16.mxu0 0
        %814 = vmatpush1.bf16.msra.mxu0 0
        %815 = vmatprep.subr.bf16.mxu0 0
        %816 = vmatpush1.bf16.msra.mxu0 0
        %817 = vmatprep.subr.bf16.mxu0 0
        %818 = vmatpush1.bf16.msra.mxu0 0
        %819 = vmatprep.subr.bf16.mxu0 0
        %820 = vmatpush1.bf16.msra.mxu0 0
        %821 = vmatprep.subr.bf16.mxu0 0
        %822 = vmatpush1.bf16.msra.mxu0 0
        %823 = vmatprep.subr.bf16.mxu0 0
        %824 = vmatpush1.bf16.msra.mxu0 0
        %825 = vmatprep.subr.bf16.mxu0 0
        %826 = vmatpush1.bf16.msra.mxu0 0
        %827 = vmatprep.subr.bf16.mxu0 0
        %828 = vmatpush1.bf16.msra.mxu0 0
        %829 = vmatprep.subr.bf16.mxu0 0
        %830 = vmatpush1.bf16.msra.mxu0 0
        %831 = vmatprep.subr.bf16.mxu0 0
        %832 = vmatpush1.bf16.msra.mxu0 0
        %833 = vmatprep.subr.bf16.mxu0 0
        %834 = vmatpush1.bf16.msra.mxu0 0
        %835 = vmatprep.subr.bf16.mxu0 0
        %836 = vmatpush1.bf16.msra.mxu0 0
        %837 = vmatprep.mubr.bf16.mxu0 0
        %838 = vmatmul.mubr.bf16.gmra.mrb[0].mxu0 %v803
        %v839 = vpop.f32.mrb[0].mxu0
        %v840 = vadd.f32 %v787, %v839
        %v841 = vpop.f32.mrb[0].mxu0
        %v842 = vpop.f32.mrb[0].mxu0
        %v843 = vpop.f32.mrb[0].mxu0
        %844 = vdwg.mxu0
        %v845 = vmul.f32 %v840, 0.35355338
        %v846 = vld [vmem:[%s648] sm:$0x1]
        %v848 = vlaneseq
        %v849 = vshrl.u32 %v848, 7
        %v850 = vsub.s32 0, %v849
        %v851 = vrot.slane %v846, %v850
        %v857 = vunpack.c.l.b16 %v773
        %v858 = vunpack.c.l.b16 %v774
        %v859 = vunpack.c.l.b16 %v775
        %v860 = vunpack.c.l.b16 %v776
        %v861 = vpack.c.b16 %v858, %v857
        %v862 = vpack.c.b16 %v860, %v859
        %v866 = vsel %vm801, %v767, 0
        %868 = vmatprep.subr.bf16.mxu0 0
        %869 = vmatpush1.bf16.msra.mxu0 %v861
        %870 = vmatprep.subr.bf16.mxu0 0
        %871 = vmatpush1.bf16.msra.mxu0 %v862
        %872 = vmatprep.subr.bf16.mxu0 0
        %873 = vmatpush1.bf16.msra.mxu0 0
        %874 = vmatprep.subr.bf16.mxu0 0
        %875 = vmatpush1.bf16.msra.mxu0 0
        %876 = vmatprep.subr.bf16.mxu0 0
        %877 = vmatpush1.bf16.msra.mxu0 0
        %878 = vmatprep.subr.bf16.mxu0 0
        %879 = vmatpush1.bf16.msra.mxu0 0
        %880 = vmatprep.subr.bf16.mxu0 0
        %881 = vmatpush1.bf16.msra.mxu0 0
        %882 = vmatprep.subr.bf16.mxu0 0
        %883 = vmatpush1.bf16.msra.mxu0 0
        %884 = vmatprep.subr.bf16.mxu0 0
        %885 = vmatpush1.bf16.msra.mxu0 0
        %886 = vmatprep.subr.bf16.mxu0 0
        %887 = vmatpush1.bf16.msra.mxu0 0
        %888 = vmatprep.subr.bf16.mxu0 0
        %889 = vmatpush1.bf16.msra.mxu0 0
        %890 = vmatprep.subr.bf16.mxu0 0
        %891 = vmatpush1.bf16.msra.mxu0 0
        %892 = vmatprep.subr.bf16.mxu0 0
        %893 = vmatpush1.bf16.msra.mxu0 0
        %894 = vmatprep.subr.bf16.mxu0 0
        %895 = vmatpush1.bf16.msra.mxu0 0
        %896 = vmatprep.subr.bf16.mxu0 0
        %897 = vmatpush1.bf16.msra.mxu0 0
        %898 = vmatprep.subr.bf16.mxu0 0
        %899 = vmatpush1.bf16.msra.mxu0 0
        %900 = vmatprep.mubr.bf16.mxu0 0
        %901 = vmatmul.mubr.bf16.gmra.mrb[0].mxu0 %v866
        %v902 = vpop.f32.mrb[0].mxu0
        %v903 = vadd.f32 %v851, %v902
        %v904 = vpop.f32.mrb[0].mxu0
        %v905 = vpop.f32.mrb[0].mxu0
        %v906 = vpop.f32.mrb[0].mxu0
        %907 = vdwg.mxu0
        %v908 = vld [vmem:[%s665] sm:$0x1]
        %v910 = vlaneseq
        %v911 = vshrl.u32 %v910, 7
        %v912 = vsub.s32 0, %v911
        %v913 = vrot.slane %v908, %v912
        %v919 = vunpack.c.l.b16 %v777
        %v920 = vunpack.c.l.b16 %v778
        %v921 = vunpack.c.l.b16 %v779
        %v922 = vunpack.c.l.b16 %v780
        %v923 = vpack.c.b16 %v920, %v919
        %v924 = vpack.c.b16 %v922, %v921
        %v928 = vsel %vm801, %v768, 0
        %930 = vmatprep.subr.bf16.mxu0 0
        %931 = vmatpush1.bf16.msra.mxu0 %v923
        %932 = vmatprep.subr.bf16.mxu0 0
        %933 = vmatpush1.bf16.msra.mxu0 %v924
        %934 = vmatprep.subr.bf16.mxu0 0
        %935 = vmatpush1.bf16.msra.mxu0 0
        %936 = vmatprep.subr.bf16.mxu0 0
        %937 = vmatpush1.bf16.msra.mxu0 0
        %938 = vmatprep.subr.bf16.mxu0 0
        %939 = vmatpush1.bf16.msra.mxu0 0
        %940 = vmatprep.subr.bf16.mxu0 0
        %941 = vmatpush1.bf16.msra.mxu0 0
        %942 = vmatprep.subr.bf16.mxu0 0
        %943 = vmatpush1.bf16.msra.mxu0 0
        %944 = vmatprep.subr.bf16.mxu0 0
        %945 = vmatpush1.bf16.msra.mxu0 0
        %946 = vmatprep.subr.bf16.mxu0 0
        %947 = vmatpush1.bf16.msra.mxu0 0
        %948 = vmatprep.subr.bf16.mxu0 0
        %949 = vmatpush1.bf16.msra.mxu0 0
        %950 = vmatprep.subr.bf16.mxu0 0
        %951 = vmatpush1.bf16.msra.mxu0 0
        %952 = vmatprep.subr.bf16.mxu0 0
        %953 = vmatpush1.bf16.msra.mxu0 0
        %954 = vmatprep.subr.bf16.mxu0 0
        %955 = vmatpush1.bf16.msra.mxu0 0
        %956 = vmatprep.subr.bf16.mxu0 0
        %957 = vmatpush1.bf16.msra.mxu0 0
        %958 = vmatprep.subr.bf16.mxu0 0
        %959 = vmatpush1.bf16.msra.mxu0 0
        %960 = vmatprep.subr.bf16.mxu0 0
        %961 = vmatpush1.bf16.msra.mxu0 0
        %962 = vmatprep.mubr.bf16.mxu0 0
        %963 = vmatmul.mubr.bf16.gmra.mrb[0].mxu0 %v928
        %v964 = vpop.f32.mrb[0].mxu0
        %v965 = vadd.f32 %v913, %v964
        %v966 = vpop.f32.mrb[0].mxu0
        %v967 = vpop.f32.mrb[0].mxu0
        %v968 = vpop.f32.mrb[0].mxu0
        %969 = vdwg.mxu0
        %v970 = vpack.c.bf16 %v845, %v845
        %v971 = vpack.c.bf16 %v903, %v903
        %vm972 = vcmask 64512
        %v974 = vsel %vm972, %v970, 0
        %v977 = vsel %vm972, %v971, 0
        %979 = vmatprep.subr.bf16.mxu0 0
        %980 = vmatpush1.bf16.xpose.msra.mxu0 %v977
        %981 = vmatprep.subr.bf16.mxu0 0
        %982 = vmatpush1.bf16.xpose.msra.mxu0 0
        %983 = vmatprep.subr.bf16.mxu0 0
        %984 = vmatpush1.bf16.xpose.msra.mxu0 0
        %985 = vmatprep.subr.bf16.mxu0 0
        %986 = vmatpush1.bf16.xpose.msra.mxu0 0
        %987 = vmatprep.subr.bf16.mxu0 0
        %988 = vmatpush1.bf16.xpose.msra.mxu0 0
        %989 = vmatprep.subr.bf16.mxu0 0
        %990 = vmatpush1.bf16.xpose.msra.mxu0 0
        %991 = vmatprep.subr.bf16.mxu0 0
        %992 = vmatpush1.bf16.xpose.msra.mxu0 0
        %993 = vmatprep.subr.bf16.mxu0 0
        %994 = vmatpush1.bf16.xpose.msra.mxu0 0
        %995 = vmatprep.subr.bf16.mxu0 0
        %996 = vmatpush1.bf16.xpose.msra.mxu0 0
        %997 = vmatprep.subr.bf16.mxu0 0
        %998 = vmatpush1.bf16.xpose.msra.mxu0 0
        %999 = vmatprep.subr.bf16.mxu0 0
        %1000 = vmatpush1.bf16.xpose.msra.mxu0 0
        %1001 = vmatprep.subr.bf16.mxu0 0
        %1002 = vmatpush1.bf16.xpose.msra.mxu0 0
        %1003 = vmatprep.subr.bf16.mxu0 0
        %1004 = vmatpush1.bf16.xpose.msra.mxu0 0
        %1005 = vmatprep.subr.bf16.mxu0 0
        %1006 = vmatpush1.bf16.xpose.msra.mxu0 0
        %1007 = vmatprep.subr.bf16.mxu0 0
        %1008 = vmatpush1.bf16.xpose.msra.mxu0 0
        %1009 = vmatprep.subr.bf16.mxu0 0
        %1010 = vmatpush1.bf16.xpose.msra.mxu0 0
        %1011 = vmatprep.mubr.bf16.mxu0 0
        %1012 = vmatmul.mubr.bf16.gmra.mrb[0].mxu0 %v974
        %v1013 = vpop.f32.mrb[0].mxu0
        %v1014 = vadd.f32 0.0, %v1013
        %v1015 = vpop.f32.mrb[0].mxu0
        %v1016 = vpop.f32.mrb[0].mxu0
        %v1017 = vpop.f32.mrb[0].mxu0
        %1018 = vdwg.mxu0
        %v1019 = vsel %vm972, %v1014, -inf
        %1020 = vmax.xlane.f32.xlu0 %v1019
        %v1021 = vpop.xlane.xlu0 %1020
        %v1022 = vsub.f32 %v1014, %v1021
        %v1023 = vmul.f32 %v1022, 1.442695
        %v1024 = vpow.pop %v1023
        %v1025 = vsel %vm972, %v1024, 0.0
        %1026 = vadd.xlane.f32.xlu0 %v1025
        %v1027 = vpop.xlane.xlu0 %1026
        %v1028 = vrcp.pop %v1027
        %v1029 = vmul.f32 %v1024, %v1028
        %v1030 = vpack.c.bf16 %v1029, %v1029
        %v1031 = vpack.c.bf16 %v965, %v965
        %v1033 = vsel %vm972, %v1030, 0
        %vm1035 = vcmask 1043456
        %v1037 = vsel %vm1035, %v1031, 0
        %1039 = vmatprep.subr.bf16.mxu0 0
        %1040 = vmatpush1.bf16.msra.mxu0 %v1037
        %1041 = vmatprep.subr.bf16.mxu0 0
        %1042 = vmatpush1.bf16.msra.mxu0 0
        %1043 = vmatprep.subr.bf16.mxu0 0
        %1044 = vmatpush1.bf16.msra.mxu0 0
        %1045 = vmatprep.subr.bf16.mxu0 0
        %1046 = vmatpush1.bf16.msra.mxu0 0
        %1047 = vmatprep.subr.bf16.mxu0 0
        %1048 = vmatpush1.bf16.msra.mxu0 0
        %1049 = vmatprep.subr.bf16.mxu0 0
        %1050 = vmatpush1.bf16.msra.mxu0 0
        %1051 = vmatprep.subr.bf16.mxu0 0
        %1052 = vmatpush1.bf16.msra.mxu0 0
        %1053 = vmatprep.subr.bf16.mxu0 0
        %1054 = vmatpush1.bf16.msra.mxu0 0
        %1055 = vmatprep.subr.bf16.mxu0 0
        %1056 = vmatpush1.bf16.msra.mxu0 0
        %1057 = vmatprep.subr.bf16.mxu0 0
        %1058 = vmatpush1.bf16.msra.mxu0 0
        %1059 = vmatprep.subr.bf16.mxu0 0
        %1060 = vmatpush1.bf16.msra.mxu0 0
        %1061 = vmatprep.subr.bf16.mxu0 0
        %1062 = vmatpush1.bf16.msra.mxu0 0
        %1063 = vmatprep.subr.bf16.mxu0 0
        %1064 = vmatpush1.bf16.msra.mxu0 0
        %1065 = vmatprep.subr.bf16.mxu0 0
        %1066 = vmatpush1.bf16.msra.mxu0 0
        %1067 = vmatprep.subr.bf16.mxu0 0
        %1068 = vmatpush1.bf16.msra.mxu0 0
        %1069 = vmatprep.subr.bf16.mxu0 0
        %1070 = vmatpush1.bf16.msra.mxu0 0
        %1071 = vmatprep.mubr.bf16.mxu0 0
        %1072 = vmatmul.mubr.bf16.gmra.mrb[0].mxu0 %v1033
        %v1073 = vpop.f32.mrb[0].mxu0
        %v1074 = vadd.f32 0.0, %v1073
        %v1075 = vpop.f32.mrb[0].mxu0
        %v1076 = vpop.f32.mrb[0].mxu0
        %v1077 = vpop.f32.mrb[0].mxu0
        %1078 = vdwg.mxu0
        %v1079 = vld [vmem:[#allocation2] sm:$0xff]
        %v1080 = vpack.c.bf16 %v1074, %v1074
        %v1082 = vsel %vm972, %v1080, 0
        %v1085 = vsel %vm1035, %v781, 0
        %1087 = vmatprep.subr.bf16.mxu0 0
        %1088 = vmatpush1.bf16.msra.mxu0 %v1085
        %1089 = vmatprep.subr.bf16.mxu0 0
        %1090 = vmatpush1.bf16.msra.mxu0 0
        %1091 = vmatprep.subr.bf16.mxu0 0
        %1092 = vmatpush1.bf16.msra.mxu0 0
        %1093 = vmatprep.subr.bf16.mxu0 0
        %1094 = vmatpush1.bf16.msra.mxu0 0
        %1095 = vmatprep.subr.bf16.mxu0 0
        %1096 = vmatpush1.bf16.msra.mxu0 0
        %1097 = vmatprep.subr.bf16.mxu0 0
        %1098 = vmatpush1.bf16.msra.mxu0 0
        %1099 = vmatprep.subr.bf16.mxu0 0
        %1100 = vmatpush1.bf16.msra.mxu0 0
        %1101 = vmatprep.subr.bf16.mxu0 0
        %1102 = vmatpush1.bf16.msra.mxu0 0
        %1103 = vmatprep.subr.bf16.mxu0 0
        %1104 = vmatpush1.bf16.msra.mxu0 0
        %1105 = vmatprep.subr.bf16.mxu0 0
        %1106 = vmatpush1.bf16.msra.mxu0 0
        %1107 = vmatprep.subr.bf16.mxu0 0
        %1108 = vmatpush1.bf16.msra.mxu0 0
        %1109 = vmatprep.subr.bf16.mxu0 0
        %1110 = vmatpush1.bf16.msra.mxu0 0
        %1111 = vmatprep.subr.bf16.mxu0 0
        %1112 = vmatpush1.bf16.msra.mxu0 0
        %1113 = vmatprep.subr.bf16.mxu0 0
        %1114 = vmatpush1.bf16.msra.mxu0 0
        %1115 = vmatprep.subr.bf16.mxu0 0
        %1116 = vmatpush1.bf16.msra.mxu0 0
        %1117 = vmatprep.subr.bf16.mxu0 0
        %1118 = vmatpush1.bf16.msra.mxu0 0
        %1119 = vmatprep.mubr.bf16.mxu0 0
        %1120 = vmatmul.mubr.bf16.gmra.mrb[0].mxu0 %v1082
        %v1121 = vpop.f32.mrb[0].mxu0
        %v1122 = vadd.f32 0.0, %v1121
        %v1123 = vpop.f32.mrb[0].mxu0
        %v1124 = vpop.f32.mrb[0].mxu0
        %v1125 = vpop.f32.mrb[0].mxu0
        %1126 = vdwg.mxu0
        %v1127 = vadd.f32 %v1079, %v1122
        %1128 = vst.msk [vmem:[#allocation2] sm:$0xff] %vm801, %v1127
        %p1129 = scmp.eq.s32.totalorder %s50, 3
        // Predicated region
        $region113: #{tpu_custom_call.1} parent=63 // pred_check
          %p1130 = pneg %p1129
        $region114: #{tpu_custom_call.1} parent=63 // pred_check_branch
          %1132 = sbr.rel (%p1130) target = $region116
        $region115: #{tpu_custom_call.1} parent=63 // pred_region
          %v1133 = vld [vmem:[#allocation2] sm:$0xff]
          %v1134 = vld [vmem:[#allocation20] sm:$0x1]
          %v1136 = vlaneseq
          %v1137 = vshrl.u32 %v1136, 7
          %v1138 = vsub.s32 0, %v1137
          %v1139 = vrot.slane %v1134, %v1138
          %v1141 = vadd.f32 %v1133, %v1139
          %1142 = vst.msk [vmem:[%s758] sm:$0xff] %vm801, %v1141
        $region116: #{tpu_custom_call.1} parent=63 // pred_fallthru
          _
        %s1143 = sand.u32 %s355, 1
        %s1144 = scalar_lea.sflag [#allocation5], %s1143
        %s1145 = sand.u32 %s355, 1
        %s1146 = smul.addr %s1145, 8
        %s1147 = scalar_lea.vmem [#allocation21], %s1146
        // Predicated region
        $region117: #{tpu_custom_call.1} parent=63 // pred_check
          %p1148 = pneg %p365
        $region118: #{tpu_custom_call.1} parent=63 // pred_check_branch
          %1150 = sbr.rel (%p1148) target = $region120
        $region119: #{tpu_custom_call.1} parent=63 // pred_region
          %s1152 = ssub.s32 128, 128
          %1153 = vsyncadd %s1144, %s1152
          %s1154 = sadd.s32 %s49, %s48
          %s1155 = smul.addr %s1154, 128
          %s1156 = scalar_lea.hbm %s11, %s1155
          %s1158 = sshll.u32 %s1147, 4
          %s1159 = int_to_ptr.vmem [resolvable:$true] %s1158
          %1161 = dma.vmem_to_hbm [thread:$0]  %s1159, 128, %s1156, %s1144
        $region120: #{tpu_custom_call.1} parent=63 // pred_fallthru
          _
      $region64: #{tpu_custom_call.1} parent=5 // pred_fallthru
        _
      %p1162 = scmp.le.s32.totalorder 2, %s38
      // Predicated region
      $region121: #{tpu_custom_call.1} parent=5 // pred_check
        %p1163 = pneg %p1162
      $region122: #{tpu_custom_call.1} parent=5 // pred_check_branch
        %1165 = sbr.rel (%p1163) target = $region124
      $region123: #{tpu_custom_call.1} parent=5 // pred_region
        %s1166 = ssub.s32 %s38, 2
        // Predicated region
        $region125: #{tpu_custom_call.1} parent=123 // pred_check
          %p1167 = pneg %p371
        $region126: #{tpu_custom_call.1} parent=123 // pred_check_branch
          %1169 = sbr.rel (%p1167) target = $region128
        $region127: #{tpu_custom_call.1} parent=123 // pred_region
          %s1170 = sand.u32 %s356, 1
          %s1171 = scalar_lea.sflag [#allocation5], %s1170
          %s1172 = sand.u32 %s356, 1
          %s1173 = smul.addr %s1172, 8
          %s1174 = scalar_lea.vmem [#allocation21], %s1173
          %1175 = dma.done %s1171, 128
        $region128: #{tpu_custom_call.1} parent=123 // pred_fallthru
          _
      $region124: #{tpu_custom_call.1} parent=5 // pred_fallthru
        _
    $region6: #{tpu_custom_call.1} parent=1 // loop_footer
      %s42 = sadd.s32 1, %s38
    $region7: #{tpu_custom_call.1} parent=1 // loop_footer_branch
      %37 = sbr.rel target = $region3
    $region8: #{tpu_custom_call.1} parent=1 // loop_exit
      _
    %1176 = vsyncpa [#allocation4], 1
    %s1177 = scalar_lea.sflag [#allocation4], 1
    %1178 = vsyncpa %s1177, 1
    %1179 = vsyncpa [#allocation7], 1
    %s1180 = scalar_lea.sflag [#allocation7], 1
    %1181 = vsyncpa %s1180, 1
    %1182 = vsyncpa [#allocation10], 1
    %s1183 = scalar_lea.sflag [#allocation10], 1
    %1184 = vsyncpa %s1183, 1
    %1185 = vsyncpa [#allocation13], 1
    %s1186 = scalar_lea.sflag [#allocation13], 1
    %1187 = vsyncpa %s1186, 1
    %1188 = vsyncpa [#allocation16], 1
    %s1189 = scalar_lea.sflag [#allocation16], 1
    %1190 = vsyncpa %s1189, 1
    %1191 = vsyncpa [#allocation19], 1
    %s1192 = scalar_lea.sflag [#allocation19], 1
    %1193 = vsyncpa %s1192, 1
    %1194 = vsyncpa [#allocation5], 1
    %s1195 = scalar_lea.sflag [#allocation5], 1
    %1196 = vsyncpa %s1195, 1

</llo_original>
